<compile_context>
chip_gen: v5e
topology: v5e:2x2
jax: 0.10.0
libtpu: 0.0.40
codegen_flags: <defaults>
</compile_context>

<pallas_src>
import jax
import jax.numpy as jnp
from jax.experimental import pallas as pl
from jax.experimental.pallas import tpu as pltpu

LANES = 128
MAX_BLOCK_ROWS = 4096                   # (4096, 128) f32 = 2 MiB per input per pipeline buffer
CHUNK_ROWS = 512                        # strip-mine width inside the kernel body
NUM_SPLITS = 2                          # leading "parallel" grid axis (both TCs on v7x)
INPUT_VMEM_BUDGET = 24 * 1024 * 1024    # double-buffered input bytes per grid step


def _round_up(x, m):
    return ((x + m - 1) // m) * m


def _make_loss_sums_kernel(num_preds, block_rows, chunk_rows, rows_total,
                           num_blocks, blocks_per_split):
    """Kernel accumulating [sum(bce), sum(p*t), sum(p), sum(t)] per prediction."""
    n_chunks = block_rows // chunk_rows
    groups = chunk_rows // 8

    def fold(v):
        # (chunk_rows, 128) -> (8, 128) sublane-group add: pure VPU, no cross-lane XLU work.
        return jnp.sum(v.reshape(groups, 8, LANES), axis=0)

    def kernel(*refs):
        pred_refs = refs[:num_preds]
        targ_ref = refs[num_preds]
        out_ref = refs[num_preds + 1]      # block (1, num_preds*4, 8, 128), resident accumulator

        c = pl.program_id(0)               # split index (parallel axis)
        i = pl.program_id(1)               # row-block index within the split (arbitrary axis)
        g = c * blocks_per_split + i       # global row-block index

        @pl.when(i == 0)
        def _init():
            out_ref[...] = jnp.zeros_like(out_ref)

        def process(masked):
            valid = rows_total - g * block_rows   # valid rows of this block inside the array

            def body(ci, accs):
                if isinstance(ci, int):
                    r0 = ci * chunk_rows
                else:
                    r0 = pl.multiple_of(ci * chunk_rows, chunk_rows)
                t = targ_ref[pl.ds(r0, chunk_rows), :].astype(jnp.float32)
                if masked:
                    row = jax.lax.broadcasted_iota(jnp.int32, (chunk_rows, LANES), 0)
                    keep = (row + r0) < valid
                new_accs = []
                for p_idx in range(num_preds):
                    x = pred_refs[p_idx][pl.ds(r0, chunk_rows), :].astype(jnp.float32)
                    # One transcendental shared between BCE and the sigmoid.
                    e = jnp.exp(-jnp.abs(x))
                    # Numerically stable BCE-with-logits: max(x,0) - x*t + log(1 + exp(-|x|)).
                    bce = jnp.maximum(x, 0.0) - x * t + jnp.log(1.0 + e)
                    inv = 1.0 / (1.0 + e)
                    p = jnp.where(x >= 0.0, inv, e * inv)   # stable sigmoid from the same e
                    vals = (bce, p * t, p, t)
                    if masked:
                        # Mask BEFORE accumulating: padded rows hold undefined data.
                        vals = tuple(jnp.where(keep, v, 0.0) for v in vals)
                    a = accs[p_idx]
                    new_accs.append(tuple(a[k] + fold(vals[k]) for k in range(4)))
                return tuple(new_accs)

            zero = jnp.zeros((8, LANES), jnp.float32)
            init = tuple(tuple(zero for _ in range(4)) for _ in range(num_preds))
            if n_chunks == 1:
                accs = body(0, init)
            else:
                accs = jax.lax.fori_loop(0, n_chunks, body, init, unroll=True)
            for p_idx in range(num_preds):
                for k in range(4):
                    out_ref[0, p_idx * 4 + k] += accs[p_idx][k]

        if num_blocks > 1:
            @pl.when(g < num_blocks - 1)
            def _bulk():
                process(masked=False)        # mask-free hot loop for all interior blocks

            @pl.when(g >= num_blocks - 1)
            def _tail():
                process(masked=True)         # partial last block + padded duplicate step
        else:
            process(masked=True)

    return kernel


def _bulk_sums(pred_slabs, targ_slab):
    """Pallas reduction over (rows, 128) slabs; returns (num_preds, 4) f32 sums
    [sum(bce), sum(p*t), sum(p), sum(t)] per prediction (targets read once from HBM)."""
    num_preds = len(pred_slabs)
    rows = targ_slab.shape[0]

    # Biggest block that keeps double-buffered native-dtype inputs inside the VMEM budget.
    bytes_per_row = 2 * LANES * sum(a.dtype.itemsize for a in (*pred_slabs, targ_slab))
    budget_rows = max(32, (INPUT_VMEM_BUDGET // bytes_per_row) // 32 * 32)
    block_rows = int(min(MAX_BLOCK_ROWS, budget_rows, _round_up(rows, 32)))
    chunk_rows = next(c for c in (CHUNK_ROWS, 256, 128, 64, 32) if block_rows % c == 0)

    num_blocks = pl.cdiv(rows, block_rows)
    blocks_per_split = pl.cdiv(num_blocks, NUM_SPLITS)

    def row_map(c, i):
        # Clamp so the padded step on an odd block count re-reads (and fully masks) the last
        # block instead of issuing an out-of-bounds DMA.
        return (jnp.minimum(c * blocks_per_split + i, num_blocks - 1), 0)

    kernel = _make_loss_sums_kernel(num_preds, block_rows, chunk_rows, rows,
                                    num_blocks, blocks_per_split)
    vmem_limit = int(min(48 * 1024 * 1024,
                         bytes_per_row * block_rows + 16 * 1024 * 1024))

    out = pl.pallas_call(
        kernel,
        out_shape=jax.ShapeDtypeStruct((NUM_SPLITS, num_preds * 4, 8, LANES), jnp.float32),
        grid_spec=pltpu.PrefetchScalarGridSpec(
            num_scalar_prefetch=0,
            grid=(NUM_SPLITS, blocks_per_split),
            in_specs=[pl.BlockSpec((block_rows, LANES), row_map)
                      for _ in range(num_preds + 1)],
            out_specs=pl.BlockSpec((1, num_preds * 4, 8, LANES),
                                   lambda c, i: (c, 0, 0, 0)),
        ),
        compiler_params=pltpu.CompilerParams(
            dimension_semantics=("parallel", "arbitrary"),
            vmem_limit_bytes=vmem_limit),
    )(*pred_slabs, targ_slab)

    # Tiny finalize in the wrapper: fold the per-split (8,128) accumulators to scalars.
    return jnp.sum(out.reshape(NUM_SPLITS, num_preds, 4, 8, LANES), axis=(0, 3, 4))


def _loss_sums(pred_list, targets):
    """Returns ((num_preds, 4) f32 sums, element count) for a list of same-sized predictions."""
    n = targets.size
    targ_flat = targets.reshape(-1)
    pred_flats = [p.reshape(-1) for p in pred_list]
    for pf in pred_flats:
        assert pf.size == n, "each prediction must match targets' element count"

    num_preds = len(pred_list)
    n_bulk = (n // LANES) * LANES
    sums = jnp.zeros((num_preds, 4), jnp.float32)

    if n_bulk > 0:
        rows = n_bulk // LANES

        def slab(a):
            a = a if n_bulk == n else a[:n_bulk]
            return a.reshape(rows, LANES)

        sums = sums + _bulk_sums([slab(pf) for pf in pred_flats], slab(targ_flat))

    if n_bulk < n:
        # Ragged tail (< 128 elements): negligible work, handled with plain jnp.
        t = targ_flat[n_bulk:].astype(jnp.float32)
        tails = []
        for pf in pred_flats:
            x = pf[n_bulk:].astype(jnp.float32)
            e = jnp.exp(-jnp.abs(x))
            bce = jnp.maximum(x, 0.0) - x * t + jnp.log1p(e)
            p = jax.nn.sigmoid(x)
            tails.append(jnp.stack([jnp.sum(bce), jnp.sum(p * t), jnp.sum(p), jnp.sum(t)]))
        sums = sums + jnp.stack(tails)

    return sums, n


def binary_combined_loss(predictions, targets, alpha=0.5, smooth=1e-5):
    """JAX/Pallas equivalent of BinaryCombinedLoss.forward (tensor or list of tensors)."""
    is_list = isinstance(predictions, (list, tuple))
    pred_list = list(predictions) if is_list else [predictions]

    sums, n = _loss_sums(pred_list, targets)          # single fused pass over HBM
    sum_bce, sum_pt, sum_p, sum_t = sums[:, 0], sums[:, 1], sums[:, 2], sums[:, 3]
    bce_loss = sum_bce / jnp.float32(n)
    dice_loss = 1.0 - (2.0 * sum_pt + smooth) / (sum_p + sum_t + smooth)
    per_pred = alpha * bce_loss + (1.0 - alpha) * dice_loss
    # alpha*mean(bce_i) + (1-alpha)*mean(dice_i) == mean_i(alpha*bce_i + (1-alpha)*dice_i)
    return jnp.mean(per_pred) if is_list else per_pred[0]


def _reference_loss(predictions, targets, alpha=0.5, smooth=1e-5):
    def single(pred):
        x = pred.reshape(-1).astype(jnp.float32)
        t = targets.reshape(-1).astype(jnp.float32)
        bce = jnp.mean(jnp.maximum(x, 0.0) - x * t + jnp.log1p(jnp.exp(-jnp.abs(x))))
        p = jax.nn.sigmoid(x)
        inter = jnp.sum(p * t)
        union = jnp.sum(p) + jnp.sum(t)
        dice_loss = 1.0 - (2.0 * inter + smooth) / (union + smooth)
        return alpha * bce + (1.0 - alpha) * dice_loss

    if isinstance(predictions, (list, tuple)):
        return sum(single(p) for p in predictions) / len(predictions)
    return single(predictions)


if __name__ == "__main__":
    key = jax.random.PRNGKey(0)
    k1, k2, k3, k4, k5 = jax.random.split(key, 5)

    # NCHW binary segmentation: batch=2, channels=1, spatial=64x64 (8192 elems -> 64x128 slab).
    shape = (2, 1, 64, 64)
    predictions = jax.random.normal(k1, shape, dtype=jnp.float32)
    predictions2 = jax.random.normal(k3, shape, dtype=jnp.float32)
    targets = jax.random.bernoulli(k2, 0.4, shape).astype(jnp.float32)

    # 1) Single-tensor predictions.
    loss = jax.block_until_ready(binary_combined_loss(predictions, targets))
    ref = _reference_loss(predictions, targets)
    assert jnp.allclose(loss, ref, rtol=1e-5, atol=1e-5), (loss, ref)

    # 2) List-of-tensors predictions (deep-supervision path) fused into one pallas_call.
    loss_list = jax.block_until_ready(
        binary_combined_loss([predictions, predictions2], targets))
    ref_list = _reference_loss([predictions, predictions2], targets)
    assert jnp.allclose(loss_list, ref_list, rtol=1e-5, atol=1e-5), (loss_list, ref_list)

    # 3) Size not a multiple of 128: exercises the masked partial block + jnp ragged tail.
    shape_odd = (2, 1, 15, 15)
    pred_odd = jax.random.normal(k4, shape_odd, dtype=jnp.float32)
    targ_odd = jax.random.bernoulli(k5, 0.4, shape_odd).astype(jnp.float32)
    loss_odd = jax.block_until_ready(binary_combined_loss(pred_odd, targ_odd))
    ref_odd = _reference_loss(pred_odd, targ_odd)
    assert jnp.allclose(loss_odd, ref_odd, rtol=1e-5, atol=1e-5), (loss_odd, ref_odd)

    print("KERNEL_OK")
</pallas_src>

<mosaic_0001>
module attributes {stable_mosaic.version = 11 : i64} {
  func.func @kernel(%arg0: i32, %arg1: i32, %arg2: memref<64x128xf32, #tpu.memory_space<vmem>>, %arg3: memref<64x128xf32, #tpu.memory_space<vmem>>, %arg4: memref<1x4x8x128xf32, #tpu.memory_space<vmem>>) attributes {dimension_semantics = [#tpu.dimension_semantics<parallel>, #tpu.dimension_semantics<arbitrary>], iteration_bounds = array<i64: 2, 1>, scalar_prefetch = 0 : i64, scratch_operands = 0 : i64, tpu.core_type = #tpu.core_type<tc>, window_params = [{transform_indices = @transform_0, window_bounds = array<i64: 64, 128>}, {transform_indices = @transform_1, window_bounds = array<i64: 64, 128>}, {transform_indices = @transform_2, window_bounds = array<i64: 1, 4, 8, 128>}]} {
    %c1_i32 = arith.constant 1 : i32
    %0 = arith.muli %arg0, %c1_i32 : i32
    %1 = arith.addi %0, %arg1 : i32
    %c0_i32 = arith.constant 0 : i32
    %2 = arith.cmpi eq, %arg1, %c0_i32 : i32
    %3 = arith.extui %2 : i1 to i32
    %c0_i32_0 = arith.constant 0 : i32
    %4 = arith.cmpi ne, %3, %c0_i32_0 : i32
    scf.if %4 {
      %cst_49 = arith.constant 0.000000e+00 : f32
      %80 = vector.broadcast %cst_49 : f32 to vector<1x4x8x128xf32>
      %c0_50 = arith.constant 0 : index
      %c0_51 = arith.constant 0 : index
      %c0_52 = arith.constant 0 : index
      %c0_53 = arith.constant 0 : index
      %81 = vector.load %arg4[%c0_50, %c0_51, %c0_52, %c0_53] : memref<1x4x8x128xf32, #tpu.memory_space<vmem>>, vector<1x4x8x128xf32>
      tpu.vector_store %arg4[%c0_50, %c0_51, %c0_52, %c0_53], %80 {strides = array<i32>} : memref<1x4x8x128xf32, #tpu.memory_space<vmem>>, vector<1x4x8x128xf32>,
    } else {
    }
    %c64_i32 = arith.constant 64 : i32
    %5 = arith.muli %1, %c64_i32 : i32
    %c64_i32_1 = arith.constant 64 : i32
    %6 = arith.subi %c64_i32_1, %5 : i32
    %cst = arith.constant 0.000000e+00 : f32
    %7 = vector.broadcast %cst : f32 to vector<8x128xf32>
    %c0 = arith.constant 0 : index
    %c0_2 = arith.constant 0 : index
    %8 = vector.load %arg3[%c0, %c0_2] : memref<64x128xf32, #tpu.memory_space<vmem>>, vector<64x128xf32>
    %9 = tpu.iota {dimensions = array<i32: 0>} : vector<64x128xi32>
    %c0_i32_3 = arith.constant 0 : i32
    %10 = vector.broadcast %c0_i32_3 : i32 to vector<64x128xi32>
    %11 = arith.addi %9, %10 : vector<64x128xi32>
    %12 = vector.broadcast %6 : i32 to vector<64x128xi32>
    %13 = arith.cmpi slt, %11, %12 : vector<64x128xi32>
    %c0_4 = arith.constant 0 : index
    %c0_5 = arith.constant 0 : index
    %14 = vector.load %arg2[%c0_4, %c0_5] : memref<64x128xf32, #tpu.memory_space<vmem>>, vector<64x128xf32>
    %15 = math.absf %14 : vector<64x128xf32>
    %cst_6 = arith.constant 0.000000e+00 : f32
    %16 = vector.broadcast %cst_6 : f32 to vector<64x128xf32>
    %17 = arith.subf %16, %15 : vector<64x128xf32>
    %18 = math.exp %17 : vector<64x128xf32>
    %cst_7 = arith.constant 0.000000e+00 : f32
    %19 = vector.broadcast %cst_7 : f32 to vector<64x128xf32>
    %20 = arith.maximumf %14, %19 : vector<64x128xf32>
    %21 = arith.mulf %14, %8 : vector<64x128xf32>
    %22 = arith.subf %20, %21 : vector<64x128xf32>
    %cst_8 = arith.constant 1.000000e+00 : f32
    %23 = vector.broadcast %cst_8 : f32 to vector<64x128xf32>
    %24 = arith.addf %23, %18 : vector<64x128xf32>
    %25 = math.log %24 : vector<64x128xf32>
    %26 = arith.addf %22, %25 : vector<64x128xf32>
    %cst_9 = arith.constant 1.000000e+00 : f32
    %27 = vector.broadcast %cst_9 : f32 to vector<64x128xf32>
    %28 = arith.addf %27, %18 : vector<64x128xf32>
    %cst_10 = arith.constant 1.000000e+00 : f32
    %29 = vector.broadcast %cst_10 : f32 to vector<64x128xf32>
    %30 = arith.divf %29, %28 : vector<64x128xf32>
    %cst_11 = arith.constant 0.000000e+00 : f32
    %31 = vector.broadcast %cst_11 : f32 to vector<64x128xf32>
    %32 = arith.cmpf oge, %14, %31 : vector<64x128xf32>
    %33 = arith.mulf %18, %30 : vector<64x128xf32>
    %34 = arith.select %32, %30, %33 : vector<64x128xi1>, vector<64x128xf32>
    %35 = arith.mulf %34, %8 : vector<64x128xf32>
    %cst_12 = arith.constant 0.000000e+00 : f32
    %36 = vector.broadcast %cst_12 : f32 to vector<64x128xf32>
    %37 = arith.select %13, %26, %36 : vector<64x128xi1>, vector<64x128xf32>
    %cst_13 = arith.constant 0.000000e+00 : f32
    %38 = vector.broadcast %cst_13 : f32 to vector<64x128xf32>
    %39 = arith.select %13, %35, %38 : vector<64x128xi1>, vector<64x128xf32>
    %cst_14 = arith.constant 0.000000e+00 : f32
    %40 = vector.broadcast %cst_14 : f32 to vector<64x128xf32>
    %41 = arith.select %13, %34, %40 : vector<64x128xi1>, vector<64x128xf32>
    %cst_15 = arith.constant 0.000000e+00 : f32
    %42 = vector.broadcast %cst_15 : f32 to vector<64x128xf32>
    %43 = arith.select %13, %8, %42 : vector<64x128xi1>, vector<64x128xf32>
    %44 = vector.shape_cast %37 : vector<64x128xf32> to vector<8x8x128xf32>
    %cst_16 = arith.constant dense<0.000000e+00> : vector<8x128xf32>
    %45 = vector.multi_reduction <add>, %44, %cst_16 [0] : vector<8x8x128xf32> to vector<8x128xf32>
    %46 = arith.addf %7, %45 : vector<8x128xf32>
    %47 = vector.shape_cast %39 : vector<64x128xf32> to vector<8x8x128xf32>
    %cst_17 = arith.constant dense<0.000000e+00> : vector<8x128xf32>
    %48 = vector.multi_reduction <add>, %47, %cst_17 [0] : vector<8x8x128xf32> to vector<8x128xf32>
    %49 = arith.addf %7, %48 : vector<8x128xf32>
    %50 = vector.shape_cast %41 : vector<64x128xf32> to vector<8x8x128xf32>
    %cst_18 = arith.constant dense<0.000000e+00> : vector<8x128xf32>
    %51 = vector.multi_reduction <add>, %50, %cst_18 [0] : vector<8x8x128xf32> to vector<8x128xf32>
    %52 = arith.addf %7, %51 : vector<8x128xf32>
    %53 = vector.shape_cast %43 : vector<64x128xf32> to vector<8x8x128xf32>
    %cst_19 = arith.constant dense<0.000000e+00> : vector<8x128xf32>
    %54 = vector.multi_reduction <add>, %53, %cst_19 [0] : vector<8x8x128xf32> to vector<8x128xf32>
    %55 = arith.addf %7, %54 : vector<8x128xf32>
    %c0_20 = arith.constant 0 : index
    %c0_21 = arith.constant 0 : index
    %c0_22 = arith.constant 0 : index
    %c0_23 = arith.constant 0 : index
    %56 = vector.load %arg4[%c0_20, %c0_21, %c0_22, %c0_23] : memref<1x4x8x128xf32, #tpu.memory_space<vmem>>, vector<1x1x8x128xf32>
    %57 = vector.shape_cast %56 : vector<1x1x8x128xf32> to vector<8x128xf32>
    %58 = arith.addf %57, %46 : vector<8x128xf32>
    %c0_24 = arith.constant 0 : index
    %c0_25 = arith.constant 0 : index
    %c0_26 = arith.constant 0 : index
    %c0_27 = arith.constant 0 : index
    %59 = vector.load %arg4[%c0_24, %c0_25, %c0_26, %c0_27] : memref<1x4x8x128xf32, #tpu.memory_space<vmem>>, vector<1x1x8x128xf32>
    %60 = vector.shape_cast %59 : vector<1x1x8x128xf32> to vector<8x128xf32>
    %61 = vector.shape_cast %58 : vector<8x128xf32> to vector<1x1x8x128xf32>
    tpu.vector_store %arg4[%c0_24, %c0_25, %c0_26, %c0_27], %61 {strides = array<i32>} : memref<1x4x8x128xf32, #tpu.memory_space<vmem>>, vector<1x1x8x128xf32>,
    %c0_28 = arith.constant 0 : index
    %c1 = arith.constant 1 : index
    %c0_29 = arith.constant 0 : index
    %c0_30 = arith.constant 0 : index
    %62 = vector.load %arg4[%c0_28, %c1, %c0_29, %c0_30] : memref<1x4x8x128xf32, #tpu.memory_space<vmem>>, vector<1x1x8x128xf32>
    %63 = vector.shape_cast %62 : vector<1x1x8x128xf32> to vector<8x128xf32>
    %64 = arith.addf %63, %49 : vector<8x128xf32>
    %c0_31 = arith.constant 0 : index
    %c1_32 = arith.constant 1 : index
    %c0_33 = arith.constant 0 : index
    %c0_34 = arith.constant 0 : index
    %65 = vector.load %arg4[%c0_31, %c1_32, %c0_33, %c0_34] : memref<1x4x8x128xf32, #tpu.memory_space<vmem>>, vector<1x1x8x128xf32>
    %66 = vector.shape_cast %65 : vector<1x1x8x128xf32> to vector<8x128xf32>
    %67 = vector.shape_cast %64 : vector<8x128xf32> to vector<1x1x8x128xf32>
    tpu.vector_store %arg4[%c0_31, %c1_32, %c0_33, %c0_34], %67 {strides = array<i32>} : memref<1x4x8x128xf32, #tpu.memory_space<vmem>>, vector<1x1x8x128xf32>,
    %c0_35 = arith.constant 0 : index
    %c2 = arith.constant 2 : index
    %c0_36 = arith.constant 0 : index
    %c0_37 = arith.constant 0 : index
    %68 = vector.load %arg4[%c0_35, %c2, %c0_36, %c0_37] : memref<1x4x8x128xf32, #tpu.memory_space<vmem>>, vector<1x1x8x128xf32>
    %69 = vector.shape_cast %68 : vector<1x1x8x128xf32> to vector<8x128xf32>
    %70 = arith.addf %69, %52 : vector<8x128xf32>
    %c0_38 = arith.constant 0 : index
    %c2_39 = arith.constant 2 : index
    %c0_40 = arith.constant 0 : index
    %c0_41 = arith.constant 0 : index
    %71 = vector.load %arg4[%c0_38, %c2_39, %c0_40, %c0_41] : memref<1x4x8x128xf32, #tpu.memory_space<vmem>>, vector<1x1x8x128xf32>
    %72 = vector.shape_cast %71 : vector<1x1x8x128xf32> to vector<8x128xf32>
    %73 = vector.shape_cast %70 : vector<8x128xf32> to vector<1x1x8x128xf32>
    tpu.vector_store %arg4[%c0_38, %c2_39, %c0_40, %c0_41], %73 {strides = array<i32>} : memref<1x4x8x128xf32, #tpu.memory_space<vmem>>, vector<1x1x8x128xf32>,
    %c0_42 = arith.constant 0 : index
    %c3 = arith.constant 3 : index
    %c0_43 = arith.constant 0 : index
    %c0_44 = arith.constant 0 : index
    %74 = vector.load %arg4[%c0_42, %c3, %c0_43, %c0_44] : memref<1x4x8x128xf32, #tpu.memory_space<vmem>>, vector<1x1x8x128xf32>
    %75 = vector.shape_cast %74 : vector<1x1x8x128xf32> to vector<8x128xf32>
    %76 = arith.addf %75, %55 : vector<8x128xf32>
    %c0_45 = arith.constant 0 : index
    %c3_46 = arith.constant 3 : index
    %c0_47 = arith.constant 0 : index
    %c0_48 = arith.constant 0 : index
    %77 = vector.load %arg4[%c0_45, %c3_46, %c0_47, %c0_48] : memref<1x4x8x128xf32, #tpu.memory_space<vmem>>, vector<1x1x8x128xf32>
    %78 = vector.shape_cast %77 : vector<1x1x8x128xf32> to vector<8x128xf32>
    %79 = vector.shape_cast %76 : vector<8x128xf32> to vector<1x1x8x128xf32>
    tpu.vector_store %arg4[%c0_45, %c3_46, %c0_47, %c0_48], %79 {strides = array<i32>} : memref<1x4x8x128xf32, #tpu.memory_space<vmem>>, vector<1x1x8x128xf32>,
    return
  }
  func.func @transform_0(%arg0: i32, %arg1: i32) -> (i32, i32) {
    %c1_i32 = arith.constant 1 : i32
    %0 = arith.muli %arg0, %c1_i32 : i32
    %1 = arith.addi %0, %arg1 : i32
    %c0_i32 = arith.constant 0 : i32
    %2 = arith.minsi %1, %c0_i32 : i32
    %c0_i32_0 = arith.constant 0 : i32
    %c0_i32_1 = arith.constant 0 : i32
    return %2, %c0_i32_0 : i32, i32
  }
  func.func @transform_1(%arg0: i32, %arg1: i32) -> (i32, i32) {
    %c1_i32 = arith.constant 1 : i32
    %0 = arith.muli %arg0, %c1_i32 : i32
    %1 = arith.addi %0, %arg1 : i32
    %c0_i32 = arith.constant 0 : i32
    %2 = arith.minsi %1, %c0_i32 : i32
    %c0_i32_0 = arith.constant 0 : i32
    %c0_i32_1 = arith.constant 0 : i32
    return %2, %c0_i32_0 : i32, i32
  }
  func.func @transform_2(%arg0: i32, %arg1: i32) -> (i32, i32, i32, i32) {
    %c0_i32 = arith.constant 0 : i32
    %c0_i32_0 = arith.constant 0 : i32
    %c0_i32_1 = arith.constant 0 : i32
    %c0_i32_2 = arith.constant 0 : i32
    return %arg0, %c0_i32, %c0_i32_0, %c0_i32_1 : i32, i32, i32, i32
  }
}

</mosaic_0001>

<llo_original>
// kernel: tpu_custom_call.1
$region0: #{tpu_custom_call.1}
  #allocation0 [shape = 'u32[]', space=smem, size = 0x4, offset = 0x4, fixed_abs, tag = 'smem constant byte address 0x4 - core index']
  #allocation1 [shape = 'u32[72,128]{1,0:T(1,128)}', space=vmem, size = 0x9000, scoped, tag = 'internal scratch']
  %s0 = inlined_call_operand.hbm [shape: f32[64,128], index: 0, kind: input, shape index: {}]
  %s1 = inlined_call_operand.hbm [shape: f32[64,128], index: 1, kind: input, shape index: {}]
  %s2 = inlined_call_operand.hbm [shape: f32[2,4,8,128], index: 2, kind: output, shape index: {}]
  %s3 = sld [smem:[#allocation0]]
  $region53: #{tpu_custom_call.1} parent=0
    _
  %s5 = ssub.s32 1, %s3
  %s6 = scalar_select 0, %s5, %s3
  $region1: #{tpu_custom_call.1} parent=0
    #allocation2 [shape = 'u8[65536]{0}', space=vmem, size = 0x10000, scoped, tag = 'input window, operand 0']
    #allocation3 [shape = 's32[2]{0}', space=sflag, size = 0x8, scoped, tag = 'scoped memory for tpu_custom_call.1']
    #allocation4 [shape = 's32[2]{0}', space=sflag, size = 0x8, scoped, tag = 'scoped memory for tpu_custom_call.1']
    #allocation5 [shape = 'u8[65536]{0}', space=vmem, size = 0x10000, scoped, tag = 'input window, operand 1']
    #allocation6 [shape = 's32[2]{0}', space=sflag, size = 0x8, scoped, tag = 'scoped memory for tpu_custom_call.1']
    #allocation7 [shape = 'u8[32768]{0}', space=vmem, size = 0x8000, scoped, tag = 'output window, operand 0']
    %7 = vsyncpa [#allocation3], 0
    %s8 = scalar_lea.sflag [#allocation3], 1
    %9 = vsyncpa %s8, 0
    %10 = vsyncpa [#allocation6], 0
    %s11 = scalar_lea.sflag [#allocation6], 1
    %12 = vsyncpa %s11, 0
    %13 = vsyncpa [#allocation4], 0
    %s14 = scalar_lea.sflag [#allocation4], 1
    %15 = vsyncpa %s14, 0
    loop: start=0, step=1, limit=4
    $region2: #{tpu_custom_call.1} parent=1 // loop_pre_header
      _
    $region3: #{tpu_custom_call.1} parent=1 // loop_header
      %s17 = sphi 0, %s21
      %p18 = scmp.ge.s32.totalorder %s17, 4
      %s24 = sphi 0, %s36
      %s25 = sphi 0, %s32
      %s26 = sphi 0, %s24
      %s27 = sphi 0, %s25
      %s28 = sphi 0, %s26
      %s29 = sphi 0, %s27
      %s45 = sphi 0, %s47
      %s48 = sphi 0, %s45
      %s49 = sphi 0, %s48
      %s65 = sphi 0, %s49
      %s77 = sphi 0, %s79
      %s80 = sphi 0, %s77
      %s81 = sphi 0, %s80
      %s97 = sphi 0, %s81
      %s103 = sphi 0, %s105
      %s106 = sphi 0, %s103
      %s107 = sphi 0, %s106
      %s123 = sphi 0, %s107
    $region4: #{tpu_custom_call.1} parent=1 // loop_header_branch
      %20 = sbr.rel (%p18) target = $region8
    $region5: #{tpu_custom_call.1} parent=1 // loop_body
      %s22 = ssub.s32 %s17, 1
      %s23 = ssub.s32 %s17, 2
      %s30 = sadd.s32 1, %s25
      %p31 = scmp.ge.s32.totalorder %s30, 1
      %s32 = scalar_select %p31, 0, %s30
      %s33 = sadd.s32 1, %s24
      %s34 = scalar_select %p31, %s33, %s24
      %p35 = scmp.ge.s32.totalorder %s34, 2
      %s36 = scalar_select %p35, 0, %s34
      %s37 = sadd.s32 %s24, %s25
      %p38 = scmp.lt.s32.totalorder %s37, 0
      %s39 = scalar_select %p38, %s37, 0
      %s40 = sadd.s32 %s36, %s32
      %p41 = scmp.lt.s32.totalorder %s40, 0
      %s42 = scalar_select %p41, %s40, 0
      %s43 = ssub.s32 %s39, %s42
      %p44 = scmp.eq.s32.totalorder %s43, 0
      %s46 = sadd.s32 %s45, 1
      %s47 = scalar_select %p44, %s45, %s46
      %p50 = pneg %p44
      %p51 = scmp.eq.s32.totalorder %s17, 1
      %p52 = por %p50, %p51
      %p53 = scmp.ne.s32.totalorder %s45, %s48
      %p54 = scmp.eq.s32.totalorder %s17, 0
      %p55 = por %p53, %p54
      %p56 = scmp.ne.s32.totalorder %s45, %s48
      %p57 = scmp.eq.s32.totalorder %s22, 1
      %p58 = por %p56, %p57
      %p59 = scmp.ne.s32.totalorder %s48, %s49
      %p60 = scmp.eq.s32.totalorder %s22, 0
      %p61 = por %p59, %p60
      %p62 = scmp.ne.s32.totalorder %s48, %s49
      %p63 = scmp.eq.s32.totalorder %s23, 1
      %p64 = por %p62, %p63
      %p66 = scmp.ne.s32.totalorder %s49, %s65
      %p67 = scmp.eq.s32.totalorder %s23, 0
      %p68 = por %p66, %p67
      %s69 = sadd.s32 %s24, %s25
      %p70 = scmp.lt.s32.totalorder %s69, 0
      %s71 = scalar_select %p70, %s69, 0
      %s72 = sadd.s32 %s36, %s32
      %p73 = scmp.lt.s32.totalorder %s72, 0
      %s74 = scalar_select %p73, %s72, 0
      %s75 = ssub.s32 %s71, %s74
      %p76 = scmp.eq.s32.totalorder %s75, 0
      %s78 = sadd.s32 %s77, 1
      %s79 = scalar_select %p76, %s77, %s78
      %p82 = pneg %p76
      %p83 = scmp.eq.s32.totalorder %s17, 1
      %p84 = por %p82, %p83
      %p85 = scmp.ne.s32.totalorder %s77, %s80
      %p86 = scmp.eq.s32.totalorder %s17, 0
      %p87 = por %p85, %p86
      %p88 = scmp.ne.s32.totalorder %s77, %s80
      %p89 = scmp.eq.s32.totalorder %s22, 1
      %p90 = por %p88, %p89
      %p91 = scmp.ne.s32.totalorder %s80, %s81
      %p92 = scmp.eq.s32.totalorder %s22, 0
      %p93 = por %p91, %p92
      %p94 = scmp.ne.s32.totalorder %s80, %s81
      %p95 = scmp.eq.s32.totalorder %s23, 1
      %p96 = por %p94, %p95
      %p98 = scmp.ne.s32.totalorder %s81, %s97
      %p99 = scmp.eq.s32.totalorder %s23, 0
      %p100 = por %p98, %p99
      %s101 = ssub.s32 %s24, %s36
      %p102 = scmp.eq.s32.totalorder %s101, 0
      %s104 = sadd.s32 %s103, 1
      %s105 = scalar_select %p102, %s103, %s104
      %p108 = pneg %p102
      %p109 = scmp.eq.s32.totalorder %s17, 1
      %p110 = por %p108, %p109
      %p111 = scmp.ne.s32.totalorder %s103, %s106
      %p112 = scmp.eq.s32.totalorder %s17, 0
      %p113 = por %p111, %p112
      %p114 = scmp.ne.s32.totalorder %s103, %s106
      %p115 = scmp.eq.s32.totalorder %s22, 1
      %p116 = por %p114, %p115
      %p117 = scmp.ne.s32.totalorder %s106, %s107
      %p118 = scmp.eq.s32.totalorder %s22, 0
      %p119 = por %p117, %p118
      %p120 = scmp.ne.s32.totalorder %s106, %s107
      %p121 = scmp.eq.s32.totalorder %s23, 1
      %p122 = por %p120, %p121
      %p124 = scmp.ne.s32.totalorder %s107, %s123
      %p125 = scmp.eq.s32.totalorder %s23, 0
      %p126 = por %p124, %p125
      %p127 = scmp.le.s32.totalorder 1, %s17
      %p128 = scmp.lt.s32.totalorder %s17, 3
      %p129 = pnand %p127, %p128
      %p130 = pneg %p129
      // Predicated region
      $region9: #{tpu_custom_call.1} parent=5 // pred_check
        _
      $region10: #{tpu_custom_call.1} parent=5 // pred_check_branch
        %132 = sbr.rel (%p129) target = $region12
      $region11: #{tpu_custom_call.1} parent=5 // pred_region
        %s133 = ssub.s32 %s17, 1
      $region12: #{tpu_custom_call.1} parent=5 // pred_fallthru
        _
      %p134 = scmp.lt.s32.totalorder %s17, 2
      // Predicated region
      $region13: #{tpu_custom_call.1} parent=5 // pred_check
        %p135 = pneg %p134
      $region14: #{tpu_custom_call.1} parent=5 // pred_check_branch
        %137 = sbr.rel (%p135) target = $region16
      $region15: #{tpu_custom_call.1} parent=5 // pred_region
        // Predicated region
        $region17: #{tpu_custom_call.1} parent=15 // pred_check
          %p138 = pneg %p55
        $region18: #{tpu_custom_call.1} parent=15 // pred_check_branch
          %140 = sbr.rel (%p138) target = $region20
        $region19: #{tpu_custom_call.1} parent=15 // pred_region
          %s141 = sand.u32 %s45, 1
          %s142 = scalar_lea.sflag [#allocation3], %s141
          %s143 = sand.u32 %s45, 1
          %s144 = smul.addr %s143, 64
          %s145 = scalar_lea.vmem [#allocation2], %s144
          %s146 = sadd.s32 %s24, %s25
          %p147 = scmp.lt.s32.totalorder %s146, 0
          %s148 = scalar_select %p147, %s146, 0
          %s149 = smul.u32 8, %s148
          %151 = vsyncadd %s142, 0
          %s152 = smul.addr %s149, 8
          %s153 = scalar_lea.hbm %s0, %s152
          %s154 = sshll.u32 %s153, 4
          %s155 = int_to_ptr.hbm [resolvable:$true] %s154
          %s156 = sshll.u32 %s145, 4
          %s157 = int_to_ptr.vmem [resolvable:$true] %s156
          %162 = dma.hbm_to_vmem [thread:$0]  %s155, 1024, %s157, %s142, 128, 128, 8
        $region20: #{tpu_custom_call.1} parent=15 // pred_fallthru
          _
        // Predicated region
        $region21: #{tpu_custom_call.1} parent=15 // pred_check
          %p163 = pneg %p87
        $region22: #{tpu_custom_call.1} parent=15 // pred_check_branch
          %165 = sbr.rel (%p163) target = $region24
        $region23: #{tpu_custom_call.1} parent=15 // pred_region
          %s166 = sand.u32 %s77, 1
          %s167 = scalar_lea.sflag [#allocation6], %s166
          %s168 = sand.u32 %s77, 1
          %s169 = smul.addr %s168, 64
          %s170 = scalar_lea.vmem [#allocation5], %s169
          %s171 = sadd.s32 %s24, %s25
          %p172 = scmp.lt.s32.totalorder %s171, 0
          %s173 = scalar_select %p172, %s171, 0
          %s174 = smul.u32 8, %s173
          %176 = vsyncadd %s167, 0
          %s177 = smul.addr %s174, 8
          %s178 = scalar_lea.hbm %s1, %s177
          %s179 = sshll.u32 %s178, 4
          %s180 = int_to_ptr.hbm [resolvable:$true] %s179
          %s181 = sshll.u32 %s170, 4
          %s182 = int_to_ptr.vmem [resolvable:$true] %s181
          %187 = dma.hbm_to_vmem [thread:$0]  %s180, 1024, %s182, %s167, 128, 128, 8
        $region24: #{tpu_custom_call.1} parent=15 // pred_fallthru
          _
      $region16: #{tpu_custom_call.1} parent=5 // pred_fallthru
        _
      %p188 = scmp.le.s32.totalorder 1, %s17
      %p189 = scmp.lt.s32.totalorder %s17, 3
      %p190 = pnand %p188, %p189
      %p191 = pneg %p190
      // Predicated region
      $region25: #{tpu_custom_call.1} parent=5 // pred_check
        _
      $region26: #{tpu_custom_call.1} parent=5 // pred_check_branch
        %193 = sbr.rel (%p190) target = $region28
      $region27: #{tpu_custom_call.1} parent=5 // pred_region
        %s194 = ssub.s32 %s17, 1
        %s195 = sand.u32 %s48, 1
        %s196 = scalar_lea.sflag [#allocation3], %s195
        %s197 = sand.u32 %s48, 1
        %s198 = smul.addr %s197, 64
        %s199 = scalar_lea.vmem [#allocation2], %s198
        // Predicated region
        $region29: #{tpu_custom_call.1} parent=27 // pred_check
          %p200 = pneg %p61
        $region30: #{tpu_custom_call.1} parent=27 // pred_check_branch
          %202 = sbr.rel (%p200) target = $region32
        $region31: #{tpu_custom_call.1} parent=27 // pred_region
          %204 = dma.done %s196, 1024
        $region32: #{tpu_custom_call.1} parent=27 // pred_fallthru
          _
        %s205 = sand.u32 %s80, 1
        %s206 = scalar_lea.sflag [#allocation6], %s205
        %s207 = sand.u32 %s80, 1
        %s208 = smul.addr %s207, 64
        %s209 = scalar_lea.vmem [#allocation5], %s208
        // Predicated region
        $region33: #{tpu_custom_call.1} parent=27 // pred_check
          %p210 = pneg %p93
        $region34: #{tpu_custom_call.1} parent=27 // pred_check_branch
          %212 = sbr.rel (%p210) target = $region36
        $region35: #{tpu_custom_call.1} parent=27 // pred_region
          %214 = dma.done %s206, 1024
        $region36: #{tpu_custom_call.1} parent=27 // pred_fallthru
          _
        %s215 = sand.u32 %s48, 1
        %s216 = scalar_lea.sflag [#allocation3], %s215
        %s217 = sand.u32 %s48, 1
        %s218 = smul.addr %s217, 64
        %s219 = scalar_lea.vmem [#allocation2], %s218
        %p220 = pneg %p61
        %p221 = pneg %p58
        %s222 = sand.u32 %s80, 1
        %s223 = scalar_lea.sflag [#allocation6], %s222
        %s224 = sand.u32 %s80, 1
        %s225 = smul.addr %s224, 64
        %s226 = scalar_lea.vmem [#allocation5], %s225
        %p227 = pneg %p93
        %p228 = pneg %p90
        %p229 = pneg %p119
        %p230 = pneg %p116
        %s231 = sand.u32 %s106, 1
        %s232 = scalar_lea.sflag [#allocation4], %s231
        %s233 = sand.u32 %s106, 1
        %s234 = smul.addr %s233, 32
        %s235 = scalar_lea.vmem [#allocation7], %s234
        %s236 = sadd.s32 %s26, %s27
        %p237 = scmp.lt.s32.totalorder %s236, 0
        %s238 = scalar_select %p237, %s236, 0
        %s239 = smul.u32 8, %s238
        %s240 = sadd.s32 %s26, %s27
        %p241 = scmp.lt.s32.totalorder %s240, 0
        %s242 = scalar_select %p241, %s240, 0
        %s243 = smul.u32 8, %s242
        %s244 = sadd.s32 %s26, %s27
        %p245 = scmp.eq.s32.totalorder %s27, 0
        // Predicated region
        $region37: #{tpu_custom_call.1} parent=27 // pred_check
          %p246 = pneg %p245
        $region38: #{tpu_custom_call.1} parent=27 // pred_check_branch
          %248 = sbr.rel (%p246) target = $region40
        $region39: #{tpu_custom_call.1} parent=27 // pred_region
          %249 = vst [vmem:[%s235] sm:$0xff] 0.0
          %250 = vst [vmem:[%s235 + $0x8] sm:$0xff] 0.0
          %251 = vst [vmem:[%s235 + $0x10] sm:$0xff] 0.0
          %252 = vst [vmem:[%s235 + $0x18] sm:$0xff] 0.0
        $region40: #{tpu_custom_call.1} parent=27 // pred_fallthru
          _
        %s253 = smul.u32 %s244, 64
        %s254 = ssub.s32 64, %s253
        %v255 = vld [vmem:[%s209] sm:$0xff]
        %v256 = vld [vmem:[%s209 + $0x8] sm:$0xff]
        %v257 = vld [vmem:[%s209 + $0x10] sm:$0xff]
        %v258 = vld [vmem:[%s209 + $0x18] sm:$0xff]
        %v259 = vld [vmem:[%s209 + $0x20] sm:$0xff]
        %v260 = vld [vmem:[%s209 + $0x28] sm:$0xff]
        %v261 = vld [vmem:[%s209 + $0x30] sm:$0xff]
        %v262 = vld [vmem:[%s209 + $0x38] sm:$0xff]
        %v263 = vlaneseq
        %v264 = vshrl.u32 %v263, 7
        %v265 = vadd.s32 %v264, 8
        %v266 = vadd.s32 %v264, 16
        %v267 = vadd.s32 %v264, 24
        %v268 = vadd.s32 %v264, 32
        %v269 = vadd.s32 %v264, 40
        %v270 = vadd.s32 %v264, 48
        %v271 = vadd.s32 %v264, 56
        %v272 = vstv %s254
        %vm273 = vcmp.lt.s32.totalorder %v264, %v272
        %vm274 = vcmp.lt.s32.totalorder %v265, %v272
        %vm275 = vcmp.lt.s32.totalorder %v266, %v272
        %vm276 = vcmp.lt.s32.totalorder %v267, %v272
        %vm277 = vcmp.lt.s32.totalorder %v268, %v272
        %vm278 = vcmp.lt.s32.totalorder %v269, %v272
        %vm279 = vcmp.lt.s32.totalorder %v270, %v272
        %vm280 = vcmp.lt.s32.totalorder %v271, %v272
        %v281 = vld [vmem:[%s199] sm:$0xff]
        %v282 = vld [vmem:[%s199 + $0x8] sm:$0xff]
        %v283 = vld [vmem:[%s199 + $0x10] sm:$0xff]
        %v284 = vld [vmem:[%s199 + $0x18] sm:$0xff]
        %v285 = vld [vmem:[%s199 + $0x20] sm:$0xff]
        %v286 = vld [vmem:[%s199 + $0x28] sm:$0xff]
        %v287 = vld [vmem:[%s199 + $0x30] sm:$0xff]
        %v288 = vld [vmem:[%s199 + $0x38] sm:$0xff]
        %v289 = vand.u32 2147483647, %v281
        %v290 = vand.u32 2147483647, %v282
        %v291 = vand.u32 2147483647, %v283
        %v292 = vand.u32 2147483647, %v284
        %v293 = vand.u32 2147483647, %v285
        %v294 = vand.u32 2147483647, %v286
        %v295 = vand.u32 2147483647, %v287
        %v296 = vand.u32 2147483647, %v288
        %v297 = vsub.f32 0.0, %v289
        %v298 = vsub.f32 0.0, %v290
        %v299 = vsub.f32 0.0, %v291
        %v300 = vsub.f32 0.0, %v292
        %v301 = vsub.f32 0.0, %v293
        %v302 = vsub.f32 0.0, %v294
        %v303 = vsub.f32 0.0, %v295
        %v304 = vsub.f32 0.0, %v296
        %v305 = vmul.f32 %v297, 1.442695
        %v306 = vpow.pop %v305
        %v307 = vmul.f32 %v298, 1.442695
        %v308 = vpow.pop %v307
        %v309 = vmul.f32 %v299, 1.442695
        %v310 = vpow.pop %v309
        %v311 = vmul.f32 %v300, 1.442695
        %v312 = vpow.pop %v311
        %v313 = vmul.f32 %v301, 1.442695
        %v314 = vpow.pop %v313
        %v315 = vmul.f32 %v302, 1.442695
        %v316 = vpow.pop %v315
        %v317 = vmul.f32 %v303, 1.442695
        %v318 = vpow.pop %v317
        %v319 = vmul.f32 %v304, 1.442695
        %v320 = vpow.pop %v319
        %v321 = vmax.f32 %v281, 0.0
        %v322 = vmax.f32 %v282, 0.0
        %v323 = vmax.f32 %v283, 0.0
        %v324 = vmax.f32 %v284, 0.0
        %v325 = vmax.f32 %v285, 0.0
        %v326 = vmax.f32 %v286, 0.0
        %v327 = vmax.f32 %v287, 0.0
        %v328 = vmax.f32 %v288, 0.0
        %v329 = vmul.f32 %v281, %v255
        %v330 = vmul.f32 %v282, %v256
        %v331 = vmul.f32 %v283, %v257
        %v332 = vmul.f32 %v284, %v258
        %v333 = vmul.f32 %v285, %v259
        %v334 = vmul.f32 %v286, %v260
        %v335 = vmul.f32 %v287, %v261
        %v336 = vmul.f32 %v288, %v262
        %v337 = vsub.f32 %v321, %v329
        %v338 = vsub.f32 %v322, %v330
        %v339 = vsub.f32 %v323, %v331
        %v340 = vsub.f32 %v324, %v332
        %v341 = vsub.f32 %v325, %v333
        %v342 = vsub.f32 %v326, %v334
        %v343 = vsub.f32 %v327, %v335
        %v344 = vsub.f32 %v328, %v336
        %v345 = vadd.f32 %v306, 1.0
        %v346 = vadd.f32 %v308, 1.0
        %v347 = vadd.f32 %v310, 1.0
        %v348 = vadd.f32 %v312, 1.0
        %v349 = vadd.f32 %v314, 1.0
        %v350 = vadd.f32 %v316, 1.0
        %v351 = vadd.f32 %v318, 1.0
        %v352 = vadd.f32 %v320, 1.0
        %v353 = vlog2.pop %v345
        %v354 = vmul.f32 %v353, 0.6931472
        %v355 = vlog2.pop %v346
        %v356 = vmul.f32 %v355, 0.6931472
        %v357 = vlog2.pop %v347
        %v358 = vmul.f32 %v357, 0.6931472
        %v359 = vlog2.pop %v348
        %v360 = vmul.f32 %v359, 0.6931472
        %v361 = vlog2.pop %v349
        %v362 = vmul.f32 %v361, 0.6931472
        %v363 = vlog2.pop %v350
        %v364 = vmul.f32 %v363, 0.6931472
        %v365 = vlog2.pop %v351
        %v366 = vmul.f32 %v365, 0.6931472
        %v367 = vlog2.pop %v352
        %v368 = vmul.f32 %v367, 0.6931472
        %v369 = vadd.f32 %v337, %v354
        %v370 = vadd.f32 %v338, %v356
        %v371 = vadd.f32 %v339, %v358
        %v372 = vadd.f32 %v340, %v360
        %v373 = vadd.f32 %v341, %v362
        %v374 = vadd.f32 %v342, %v364
        %v375 = vadd.f32 %v343, %v366
        %v376 = vadd.f32 %v344, %v368
        %v377 = vrcp.pop %v345
        %v378 = vmul.f32 %v345, %v377
        %v379 = vsub.f32 1.0, %v378
        %v380 = vmul.f32 %v377, %v379
        %v381 = vadd.f32 %v377, %v380
        %vm382 = vweird.f32 %v345
        %vm383 = vweird.f32 %v377
        %vm384 = vmor %vm382, %vm383
        %v385 = vsel %vm384, %v377, %v381
        %v386 = vand.u32 2147483647, %v345
        %vm387 = vcmp.eq.f32.partialorder %v386, 8.507059e+37
        %v388 = vand.u32 %v345, 2147483648
        %v389 = vor.u32 1.1754944e-38, %v388
        %v390 = vsel %vm387, %v389, %v385
        %v391 = vmul.f32 1.0, %v390
        %v392 = vrcp.pop %v346
        %v393 = vmul.f32 %v346, %v392
        %v394 = vsub.f32 1.0, %v393
        %v395 = vmul.f32 %v392, %v394
        %v396 = vadd.f32 %v392, %v395
        %vm397 = vweird.f32 %v346
        %vm398 = vweird.f32 %v392
        %vm399 = vmor %vm397, %vm398
        %v400 = vsel %vm399, %v392, %v396
        %v401 = vand.u32 2147483647, %v346
        %vm402 = vcmp.eq.f32.partialorder %v401, 8.507059e+37
        %v403 = vand.u32 %v346, 2147483648
        %v404 = vor.u32 1.1754944e-38, %v403
        %v405 = vsel %vm402, %v404, %v400
        %v406 = vmul.f32 1.0, %v405
        %v407 = vrcp.pop %v347
        %v408 = vmul.f32 %v347, %v407
        %v409 = vsub.f32 1.0, %v408
        %v410 = vmul.f32 %v407, %v409
        %v411 = vadd.f32 %v407, %v410
        %vm412 = vweird.f32 %v347
        %vm413 = vweird.f32 %v407
        %vm414 = vmor %vm412, %vm413
        %v415 = vsel %vm414, %v407, %v411
        %v416 = vand.u32 2147483647, %v347
        %vm417 = vcmp.eq.f32.partialorder %v416, 8.507059e+37
        %v418 = vand.u32 %v347, 2147483648
        %v419 = vor.u32 1.1754944e-38, %v418
        %v420 = vsel %vm417, %v419, %v415
        %v421 = vmul.f32 1.0, %v420
        %v422 = vrcp.pop %v348
        %v423 = vmul.f32 %v348, %v422
        %v424 = vsub.f32 1.0, %v423
        %v425 = vmul.f32 %v422, %v424
        %v426 = vadd.f32 %v422, %v425
        %vm427 = vweird.f32 %v348
        %vm428 = vweird.f32 %v422
        %vm429 = vmor %vm427, %vm428
        %v430 = vsel %vm429, %v422, %v426
        %v431 = vand.u32 2147483647, %v348
        %vm432 = vcmp.eq.f32.partialorder %v431, 8.507059e+37
        %v433 = vand.u32 %v348, 2147483648
        %v434 = vor.u32 1.1754944e-38, %v433
        %v435 = vsel %vm432, %v434, %v430
        %v436 = vmul.f32 1.0, %v435
        %v437 = vrcp.pop %v349
        %v438 = vmul.f32 %v349, %v437
        %v439 = vsub.f32 1.0, %v438
        %v440 = vmul.f32 %v437, %v439
        %v441 = vadd.f32 %v437, %v440
        %vm442 = vweird.f32 %v349
        %vm443 = vweird.f32 %v437
        %vm444 = vmor %vm442, %vm443
        %v445 = vsel %vm444, %v437, %v441
        %v446 = vand.u32 2147483647, %v349
        %vm447 = vcmp.eq.f32.partialorder %v446, 8.507059e+37
        %v448 = vand.u32 %v349, 2147483648
        %v449 = vor.u32 1.1754944e-38, %v448
        %v450 = vsel %vm447, %v449, %v445
        %v451 = vmul.f32 1.0, %v450
        %v452 = vrcp.pop %v350
        %v453 = vmul.f32 %v350, %v452
        %v454 = vsub.f32 1.0, %v453
        %v455 = vmul.f32 %v452, %v454
        %v456 = vadd.f32 %v452, %v455
        %vm457 = vweird.f32 %v350
        %vm458 = vweird.f32 %v452
        %vm459 = vmor %vm457, %vm458
        %v460 = vsel %vm459, %v452, %v456
        %v461 = vand.u32 2147483647, %v350
        %vm462 = vcmp.eq.f32.partialorder %v461, 8.507059e+37
        %v463 = vand.u32 %v350, 2147483648
        %v464 = vor.u32 1.1754944e-38, %v463
        %v465 = vsel %vm462, %v464, %v460
        %v466 = vmul.f32 1.0, %v465
        %v467 = vrcp.pop %v351
        %v468 = vmul.f32 %v351, %v467
        %v469 = vsub.f32 1.0, %v468
        %v470 = vmul.f32 %v467, %v469
        %v471 = vadd.f32 %v467, %v470
        %vm472 = vweird.f32 %v351
        %vm473 = vweird.f32 %v467
        %vm474 = vmor %vm472, %vm473
        %v475 = vsel %vm474, %v467, %v471
        %v476 = vand.u32 2147483647, %v351
        %vm477 = vcmp.eq.f32.partialorder %v476, 8.507059e+37
        %v478 = vand.u32 %v351, 2147483648
        %v479 = vor.u32 1.1754944e-38, %v478
        %v480 = vsel %vm477, %v479, %v475
        %v481 = vmul.f32 1.0, %v480
        %v482 = vrcp.pop %v352
        %v483 = vmul.f32 %v352, %v482
        %v484 = vsub.f32 1.0, %v483
        %v485 = vmul.f32 %v482, %v484
        %v486 = vadd.f32 %v482, %v485
        %vm487 = vweird.f32 %v352
        %vm488 = vweird.f32 %v482
        %vm489 = vmor %vm487, %vm488
        %v490 = vsel %vm489, %v482, %v486
        %v491 = vand.u32 2147483647, %v352
        %vm492 = vcmp.eq.f32.partialorder %v491, 8.507059e+37
        %v493 = vand.u32 %v352, 2147483648
        %v494 = vor.u32 1.1754944e-38, %v493
        %v495 = vsel %vm492, %v494, %v490
        %v496 = vmul.f32 1.0, %v495
        %vm497 = vcmp.ge.f32.partialorder %v281, 0.0
        %vm498 = vcmp.ge.f32.partialorder %v282, 0.0
        %vm499 = vcmp.ge.f32.partialorder %v283, 0.0
        %vm500 = vcmp.ge.f32.partialorder %v284, 0.0
        %vm501 = vcmp.ge.f32.partialorder %v285, 0.0
        %vm502 = vcmp.ge.f32.partialorder %v286, 0.0
        %vm503 = vcmp.ge.f32.partialorder %v287, 0.0
        %vm504 = vcmp.ge.f32.partialorder %v288, 0.0
        %v505 = vmul.f32 %v306, %v391
        %v506 = vmul.f32 %v308, %v406
        %v507 = vmul.f32 %v310, %v421
        %v508 = vmul.f32 %v312, %v436
        %v509 = vmul.f32 %v314, %v451
        %v510 = vmul.f32 %v316, %v466
        %v511 = vmul.f32 %v318, %v481
        %v512 = vmul.f32 %v320, %v496
        %v513 = vsel %vm497, %v391, %v505
        %v514 = vsel %vm498, %v406, %v506
        %v515 = vsel %vm499, %v421, %v507
        %v516 = vsel %vm500, %v436, %v508
        %v517 = vsel %vm501, %v451, %v509
        %v518 = vsel %vm502, %v466, %v510
        %v519 = vsel %vm503, %v481, %v511
        %v520 = vsel %vm504, %v496, %v512
        %v521 = vmul.f32 %v513, %v255
        %v522 = vmul.f32 %v514, %v256
        %v523 = vmul.f32 %v515, %v257
        %v524 = vmul.f32 %v516, %v258
        %v525 = vmul.f32 %v517, %v259
        %v526 = vmul.f32 %v518, %v260
        %v527 = vmul.f32 %v519, %v261
        %v528 = vmul.f32 %v520, %v262
        %v529 = vsel %vm273, %v369, 0.0
        %v530 = vsel %vm274, %v370, 0.0
        %v531 = vsel %vm275, %v371, 0.0
        %v532 = vsel %vm276, %v372, 0.0
        %v533 = vsel %vm277, %v373, 0.0
        %v534 = vsel %vm278, %v374, 0.0
        %v535 = vsel %vm279, %v375, 0.0
        %v536 = vsel %vm280, %v376, 0.0
        %v537 = vsel %vm273, %v521, 0.0
        %v538 = vsel %vm274, %v522, 0.0
        %v539 = vsel %vm275, %v523, 0.0
        %v540 = vsel %vm276, %v524, 0.0
        %v541 = vsel %vm277, %v525, 0.0
        %v542 = vsel %vm278, %v526, 0.0
        %v543 = vsel %vm279, %v527, 0.0
        %v544 = vsel %vm280, %v528, 0.0
        %v545 = vsel %vm273, %v513, 0.0
        %v546 = vsel %vm274, %v514, 0.0
        %v547 = vsel %vm275, %v515, 0.0
        %v548 = vsel %vm276, %v516, 0.0
        %v549 = vsel %vm277, %v517, 0.0
        %v550 = vsel %vm278, %v518, 0.0
        %v551 = vsel %vm279, %v519, 0.0
        %v552 = vsel %vm280, %v520, 0.0
        %v553 = vsel %vm273, %v255, 0.0
        %v554 = vsel %vm274, %v256, 0.0
        %v555 = vsel %vm275, %v257, 0.0
        %v556 = vsel %vm276, %v258, 0.0
        %v557 = vsel %vm277, %v259, 0.0
        %v558 = vsel %vm278, %v260, 0.0
        %v559 = vsel %vm279, %v261, 0.0
        %v560 = vsel %vm280, %v262, 0.0
        %v561 = vadd.f32 %v529, %v530
        %v562 = vadd.f32 %v561, %v531
        %v563 = vadd.f32 %v562, %v532
        %v564 = vadd.f32 %v563, %v533
        %v565 = vadd.f32 %v564, %v534
        %v566 = vadd.f32 %v565, %v535
        %v567 = vadd.f32 %v566, %v536
        %v568 = vadd.f32 %v567, 0.0
        %v569 = vadd.f32 %v537, %v538
        %v570 = vadd.f32 %v569, %v539
        %v571 = vadd.f32 %v570, %v540
        %v572 = vadd.f32 %v571, %v541
        %v573 = vadd.f32 %v572, %v542
        %v574 = vadd.f32 %v573, %v543
        %v575 = vadd.f32 %v574, %v544
        %v576 = vadd.f32 %v575, 0.0
        %v577 = vadd.f32 %v545, %v546
        %v578 = vadd.f32 %v577, %v547
        %v579 = vadd.f32 %v578, %v548
        %v580 = vadd.f32 %v579, %v549
        %v581 = vadd.f32 %v580, %v550
        %v582 = vadd.f32 %v581, %v551
        %v583 = vadd.f32 %v582, %v552
        %v584 = vadd.f32 %v583, 0.0
        %v585 = vadd.f32 %v553, %v554
        %v586 = vadd.f32 %v585, %v555
        %v587 = vadd.f32 %v586, %v556
        %v588 = vadd.f32 %v587, %v557
        %v589 = vadd.f32 %v588, %v558
        %v590 = vadd.f32 %v589, %v559
        %v591 = vadd.f32 %v590, %v560
        %v592 = vadd.f32 %v591, 0.0
        %v593 = vld [vmem:[%s235] sm:$0xff]
        %v594 = vadd.f32 %v593, %v568
        %595 = vst [vmem:[%s235] sm:$0xff] %v594
        %s596 = scalar_lea.vmem %s235, 8 [#allocation7]
        %v597 = vld [vmem:[%s596] sm:$0xff]
        %v598 = vadd.f32 %v597, %v576
        %599 = vst [vmem:[%s596] sm:$0xff] %v598
        %s600 = scalar_lea.vmem %s235, 16 [#allocation7]
        %v601 = vld [vmem:[%s600] sm:$0xff]
        %v602 = vadd.f32 %v601, %v584
        %603 = vst [vmem:[%s600] sm:$0xff] %v602
        %s604 = scalar_lea.vmem %s235, 24 [#allocation7]
        %v605 = vld [vmem:[%s604] sm:$0xff]
        %v606 = vadd.f32 %v605, %v592
        %607 = vst [vmem:[%s604] sm:$0xff] %v606
        %s608 = sand.u32 %s106, 1
        %s609 = scalar_lea.sflag [#allocation4], %s608
        %s610 = sand.u32 %s106, 1
        %s611 = smul.addr %s610, 32
        %s612 = scalar_lea.vmem [#allocation7], %s611
        // Predicated region
        $region41: #{tpu_custom_call.1} parent=27 // pred_check
          %p613 = pneg %p116
        $region42: #{tpu_custom_call.1} parent=27 // pred_check_branch
          %615 = sbr.rel (%p613) target = $region44
        $region43: #{tpu_custom_call.1} parent=27 // pred_region
          %617 = vsyncadd %s609, 0
          %s618 = smul.addr %s26, 4
          %s619 = smul.addr %s618, 8
          %s620 = scalar_lea.hbm %s2, %s619
          %s621 = sshll.u32 %s612, 4
          %s622 = int_to_ptr.vmem [resolvable:$true] %s621
          %s623 = sshll.u32 %s620, 4
          %s624 = int_to_ptr.hbm [resolvable:$true] %s623
          %629 = dma.vmem_to_hbm [thread:$0]  %s622, 512, %s624, %s609, 128, 128, 8
        $region44: #{tpu_custom_call.1} parent=27 // pred_fallthru
          _
      $region28: #{tpu_custom_call.1} parent=5 // pred_fallthru
        _
      %p630 = scmp.le.s32.totalorder 2, %s17
      // Predicated region
      $region45: #{tpu_custom_call.1} parent=5 // pred_check
        %p631 = pneg %p630
      $region46: #{tpu_custom_call.1} parent=5 // pred_check_branch
        %633 = sbr.rel (%p631) target = $region48
      $region47: #{tpu_custom_call.1} parent=5 // pred_region
        %s634 = ssub.s32 %s17, 2
        // Predicated region
        $region49: #{tpu_custom_call.1} parent=47 // pred_check
          %p635 = pneg %p122
        $region50: #{tpu_custom_call.1} parent=47 // pred_check_branch
          %637 = sbr.rel (%p635) target = $region52
        $region51: #{tpu_custom_call.1} parent=47 // pred_region
          %s638 = sand.u32 %s107, 1
          %s639 = scalar_lea.sflag [#allocation4], %s638
          %s640 = sand.u32 %s107, 1
          %s641 = smul.addr %s640, 32
          %s642 = scalar_lea.vmem [#allocation7], %s641
          %644 = dma.done %s639, 512
        $region52: #{tpu_custom_call.1} parent=47 // pred_fallthru
          _
      $region48: #{tpu_custom_call.1} parent=5 // pred_fallthru
        _
    $region6: #{tpu_custom_call.1} parent=1 // loop_footer
      %s21 = sadd.s32 1, %s17
    $region7: #{tpu_custom_call.1} parent=1 // loop_footer_branch
      %16 = sbr.rel target = $region3
    $region8: #{tpu_custom_call.1} parent=1 // loop_exit
      _
    %645 = vsyncpa [#allocation3], 1
    %s646 = scalar_lea.sflag [#allocation3], 1
    %647 = vsyncpa %s646, 1
    %648 = vsyncpa [#allocation6], 1
    %s649 = scalar_lea.sflag [#allocation6], 1
    %650 = vsyncpa %s649, 1
    %651 = vsyncpa [#allocation4], 1
    %s652 = scalar_lea.sflag [#allocation4], 1
    %653 = vsyncpa %s652, 1

</llo_original>
